<compile_context>
chip_gen: v5e
topology: v5e:2x2
jax: 0.10.0
libtpu: 0.0.40
codegen_flags: <defaults>
</compile_context>

<pallas_src>
import math

import jax
import jax.numpy as jnp
from jax.experimental import pallas as pl
from jax.experimental.pallas import tpu as pltpu


def mlp_kernel(x_ref, w1_ref, b1_ref, w2_ref, b2_ref, o_ref):
    # x_ref : (tr, 128)       f32   row = 32 samples x 4 features (natural packing)
    # w1_ref: (128, 1024)     bf16  = kron(I_32, W1)
    # b1_ref: (1, 1024)       f32   = tile(b1, 32)
    # w2_ref: (1024, 64)      bf16  = kron(I_32, W2)
    # b2_ref: (1, 64)         f32   = tile(b2, 32)
    # o_ref : (tr, 64)        f32   row = 32 samples x 2 outputs (natural packing)
    xb = x_ref[...].astype(jnp.bfloat16)
    h = jnp.dot(xb, w1_ref[...], preferred_element_type=jnp.float32)
    h = jnp.maximum(h + b1_ref[...], 0.0)                     # bias + ReLU in f32
    out = jnp.dot(h.astype(jnp.bfloat16), w2_ref[...],
                  preferred_element_type=jnp.float32)
    o_ref[...] = out + b2_ref[...]


def regression_model_forward(x, w1, b1, w2, b2, *, block_b=65536):
    """Forward pass of RegressionModel.

    x : (B, in_features) float32
    w1: (in_features, hidden)      b1: (hidden,)
    w2: (hidden, out_features)     b2: (out_features,)
    returns (B, out_features) float32
    """
    B, in_features = x.shape
    hidden = w1.shape[1]
    out_features = w2.shape[1]
    assert 128 % in_features == 0, "in_features must divide the 128-lane vreg"

    spr = 128 // in_features           # samples per packed row (32)
    lane_h = spr * hidden              # 1024
    lane_o = spr * out_features        # 64

    # --- pack x: (B, in) -> (Rp, 128).  Row-major merge reshape => bitcast, no copy.
    Bp = pl.cdiv(B, spr) * spr
    if Bp != B:
        # Ragged batch: pad < spr rows (the only copy in the whole wrapper).
        x = jnp.pad(x, ((0, Bp - B), (0, 0)))
    Rp = Bp // spr
    x_packed = x.astype(jnp.float32).reshape(Rp, spr * in_features)

    # --- fold the de-interleave into the weights: block-diagonal kron(I_spr, W).
    eye = jnp.eye(spr, dtype=jnp.float32)
    w1bd = jnp.kron(eye, w1.astype(jnp.float32)).astype(jnp.bfloat16)   # (128, lane_h)
    w2bd = jnp.kron(eye, w2.astype(jnp.float32)).astype(jnp.bfloat16)   # (lane_h, lane_o)
    b1t = jnp.tile(b1.astype(jnp.float32), spr).reshape(1, lane_h)
    b2t = jnp.tile(b2.astype(jnp.float32), spr).reshape(1, lane_o)

    # --- row tile: large (amortize per-step overhead), multiple of 8 sublanes,
    #     and >= 2 grid steps when possible so both v7x TensorCores are fed.
    max_rows = max(8, block_b // spr)
    if Rp <= 8:
        tr = Rp                                        # full extent, single block
    else:
        tr = min(max_rows, ((((Rp + 1) // 2) + 7) // 8) * 8)
    grid = (pl.cdiv(Rp, tr),)

    flops = 2 * Rp * (spr * in_features * lane_h + lane_h * lane_o)
    bytes_accessed = ((x_packed.size + Rp * lane_o) * 4
                      + (w1bd.size + w2bd.size) * 2
                      + (b1t.size + b2t.size) * 4)

    out_packed = pl.pallas_call(
        mlp_kernel,
        out_shape=jax.ShapeDtypeStruct((Rp, lane_o), jnp.float32),
        grid=grid,
        in_specs=[
            pl.BlockSpec((tr, spr * in_features), lambda i: (i, 0)),      # x (streamed)
            pl.BlockSpec((spr * in_features, lane_h), lambda i: (0, 0)),  # W1bd (resident)
            pl.BlockSpec((1, lane_h), lambda i: (0, 0)),                  # b1   (resident)
            pl.BlockSpec((lane_h, lane_o), lambda i: (0, 0)),             # W2bd (resident)
            pl.BlockSpec((1, lane_o), lambda i: (0, 0)),                  # b2   (resident)
        ],
        out_specs=pl.BlockSpec((tr, lane_o), lambda i: (i, 0)),
        compiler_params=pltpu.CompilerParams(
            dimension_semantics=("parallel",),
            vmem_limit_bytes=44 * 1024 * 1024),
        cost_estimate=pl.CostEstimate(flops=int(flops), transcendentals=0,
                                      bytes_accessed=int(bytes_accessed)),
    )(x_packed, w1bd, b1t, w2bd, b2t)

    out = out_packed.reshape(Bp, out_features)         # free bitcast reshape
    return out if Bp == B else out[:B]


def init_params(key, input_size=4, hidden_size=32, output_size=2):
    """Deterministic init mimicking nn.Linear default (uniform +/- 1/sqrt(fan_in))."""
    k1, k2, k3, k4 = jax.random.split(key, 4)
    bound1 = 1.0 / math.sqrt(input_size)
    bound2 = 1.0 / math.sqrt(hidden_size)
    # Weights stored as (in, out); expanded to block-diagonal form inside the wrapper.
    w1 = jax.random.uniform(k1, (input_size, hidden_size), jnp.float32, -bound1, bound1)
    b1 = jax.random.uniform(k2, (hidden_size,), jnp.float32, -bound1, bound1)
    w2 = jax.random.uniform(k3, (hidden_size, output_size), jnp.float32, -bound2, bound2)
    b2 = jax.random.uniform(k4, (output_size,), jnp.float32, -bound2, bound2)
    return w1, b1, w2, b2


if __name__ == "__main__":
    key = jax.random.PRNGKey(0)
    k_params, k_x1, k_x2 = jax.random.split(key, 3)

    input_size, hidden_size, output_size = 4, 32, 2
    w1, b1, w2, b2 = init_params(k_params, input_size, hidden_size, output_size)

    def ref_f32(x):
        return jnp.maximum(x @ w1 + b1[None, :], 0.0) @ w2 + b2[None, :]

    def ref_bf16(x):
        # Mirrors the kernel numerics: bf16 operands on the MXU, f32 accumulate,
        # bias + ReLU in f32 (bf16-on-the-wire per the perf review).
        h = jnp.dot(x.astype(jnp.bfloat16), w1.astype(jnp.bfloat16),
                    preferred_element_type=jnp.float32) + b1[None, :]
        h = jnp.maximum(h, 0.0)
        return jnp.dot(h.astype(jnp.bfloat16), w2.astype(jnp.bfloat16),
                       preferred_element_type=jnp.float32) + b2[None, :]

    # Case 1: B multiple of 32 -> fully copy-free wrapper path, single grid step.
    x_small = jax.random.normal(k_x1, (256, input_size), jnp.float32)
    out_small = jax.block_until_ready(
        regression_model_forward(x_small, w1, b1, w2, b2))
    assert out_small.shape == (256, output_size)
    assert jnp.allclose(out_small, ref_bf16(x_small), atol=2e-3, rtol=2e-3)
    assert jnp.allclose(out_small, ref_f32(x_small), atol=1e-1, rtol=1e-1)

    # Case 2: ragged batch (small tail pad) + multi-step grid with a partial edge block.
    x_big = jax.random.normal(k_x2, (1000, input_size), jnp.float32)
    out_big = jax.block_until_ready(
        regression_model_forward(x_big, w1, b1, w2, b2, block_b=1024))
    assert out_big.shape == (1000, output_size)
    assert jnp.allclose(out_big, ref_bf16(x_big), atol=2e-3, rtol=2e-3)
    assert jnp.allclose(out_big, ref_f32(x_big), atol=1e-1, rtol=1e-1)

    print("KERNEL_OK")
</pallas_src>

<mosaic_0001>
module attributes {stable_mosaic.version = 11 : i64} {
  func.func @mlp_kernel(%arg0: i32, %arg1: memref<8x128xf32, #tpu.memory_space<vmem>>, %arg2: memref<128x1024xbf16, #tpu.memory_space<vmem>>, %arg3: memref<1x1024xf32, #tpu.memory_space<vmem>>, %arg4: memref<1024x64xbf16, #tpu.memory_space<vmem>>, %arg5: memref<1x64xf32, #tpu.memory_space<vmem>>, %arg6: memref<8x64xf32, #tpu.memory_space<vmem>>) attributes {dimension_semantics = [#tpu.dimension_semantics<parallel>], iteration_bounds = array<i64: 1>, scalar_prefetch = 0 : i64, scratch_operands = 0 : i64, tpu.core_type = #tpu.core_type<tc>, window_params = [{transform_indices = @transform_0, window_bounds = array<i64: 8, 128>}, {pipeline_mode = #tpu.pipeline_mode<synchronous>, transform_indices = @transform_1, window_bounds = array<i64: 128, 1024>}, {pipeline_mode = #tpu.pipeline_mode<synchronous>, transform_indices = @transform_2, window_bounds = array<i64: 1, 1024>}, {pipeline_mode = #tpu.pipeline_mode<synchronous>, transform_indices = @transform_3, window_bounds = array<i64: 1024, 64>}, {pipeline_mode = #tpu.pipeline_mode<synchronous>, transform_indices = @transform_4, window_bounds = array<i64: 1, 64>}, {transform_indices = @transform_5, window_bounds = array<i64: 8, 64>}]} {
    %c0 = arith.constant 0 : index
    %c0_0 = arith.constant 0 : index
    %0 = vector.load %arg1[%c0, %c0_0] : memref<8x128xf32, #tpu.memory_space<vmem>>, vector<8x128xf32>
    %1 = arith.truncf %0 : vector<8x128xf32> to vector<8x128xbf16>
    %c0_1 = arith.constant 0 : index
    %c0_2 = arith.constant 0 : index
    %2 = vector.load %arg2[%c0_1, %c0_2] : memref<128x1024xbf16, #tpu.memory_space<vmem>>, vector<128x1024xbf16>
    %cst = arith.constant dense<0.000000e+00> : vector<8x1024xf32>
    %3 = tpu.matmul %1, %2, %cst {dimension_numbers = #tpu.dot_dimension_numbers<[1], [0], [0], [1], [0, 0, 1, 1], [], []>} : vector<8x128xbf16>, vector<128x1024xbf16>, vector<8x1024xf32> -> vector<8x1024xf32>
    %c0_3 = arith.constant 0 : index
    %c0_4 = arith.constant 0 : index
    %4 = vector.load %arg3[%c0_3, %c0_4] : memref<1x1024xf32, #tpu.memory_space<vmem>>, vector<1x1024xf32>
    %5 = vector.broadcast %4 : vector<1x1024xf32> to vector<8x1024xf32>
    %6 = arith.addf %3, %5 : vector<8x1024xf32>
    %cst_5 = arith.constant 0.000000e+00 : f32
    %7 = vector.broadcast %cst_5 : f32 to vector<8x1024xf32>
    %8 = arith.maximumf %6, %7 : vector<8x1024xf32>
    %9 = arith.truncf %8 : vector<8x1024xf32> to vector<8x1024xbf16>
    %c0_6 = arith.constant 0 : index
    %c0_7 = arith.constant 0 : index
    %10 = vector.load %arg4[%c0_6, %c0_7] : memref<1024x64xbf16, #tpu.memory_space<vmem>>, vector<1024x64xbf16>
    %cst_8 = arith.constant dense<0.000000e+00> : vector<8x64xf32>
    %11 = tpu.matmul %9, %10, %cst_8 {dimension_numbers = #tpu.dot_dimension_numbers<[1], [0], [0], [1], [0, 0, 1, 1], [], []>} : vector<8x1024xbf16>, vector<1024x64xbf16>, vector<8x64xf32> -> vector<8x64xf32>
    %c0_9 = arith.constant 0 : index
    %c0_10 = arith.constant 0 : index
    %12 = vector.load %arg5[%c0_9, %c0_10] : memref<1x64xf32, #tpu.memory_space<vmem>>, vector<1x64xf32>
    %13 = vector.broadcast %12 : vector<1x64xf32> to vector<8x64xf32>
    %14 = arith.addf %11, %13 : vector<8x64xf32>
    %c0_11 = arith.constant 0 : index
    %c0_12 = arith.constant 0 : index
    %15 = vector.load %arg6[%c0_11, %c0_12] : memref<8x64xf32, #tpu.memory_space<vmem>>, vector<8x64xf32>
    tpu.vector_store %arg6[%c0_11, %c0_12], %14 {strides = array<i32>} : memref<8x64xf32, #tpu.memory_space<vmem>>, vector<8x64xf32>,
    return
  }
  func.func @transform_0(%arg0: i32) -> (i32, i32) {
    %c0_i32 = arith.constant 0 : i32
    %c0_i32_0 = arith.constant 0 : i32
    return %arg0, %c0_i32 : i32, i32
  }
  func.func @transform_1(%arg0: i32) -> (i32, i32) {
    %c0_i32 = arith.constant 0 : i32
    %c0_i32_0 = arith.constant 0 : i32
    %c0_i32_1 = arith.constant 0 : i32
    return %c0_i32, %c0_i32_0 : i32, i32
  }
  func.func @transform_2(%arg0: i32) -> (i32, i32) {
    %c0_i32 = arith.constant 0 : i32
    %c0_i32_0 = arith.constant 0 : i32
    %c0_i32_1 = arith.constant 0 : i32
    return %c0_i32, %c0_i32_0 : i32, i32
  }
  func.func @transform_3(%arg0: i32) -> (i32, i32) {
    %c0_i32 = arith.constant 0 : i32
    %c0_i32_0 = arith.constant 0 : i32
    %c0_i32_1 = arith.constant 0 : i32
    return %c0_i32, %c0_i32_0 : i32, i32
  }
  func.func @transform_4(%arg0: i32) -> (i32, i32) {
    %c0_i32 = arith.constant 0 : i32
    %c0_i32_0 = arith.constant 0 : i32
    %c0_i32_1 = arith.constant 0 : i32
    return %c0_i32, %c0_i32_0 : i32, i32
  }
  func.func @transform_5(%arg0: i32) -> (i32, i32) {
    %c0_i32 = arith.constant 0 : i32
    %c0_i32_0 = arith.constant 0 : i32
    return %arg0, %c0_i32 : i32, i32
  }
}

</mosaic_0001>

<llo_original>
// kernel: tpu_custom_call.1
$region0: #{tpu_custom_call.1}
  #allocation0 [shape = 'u32[]', space=smem, size = 0x4, offset = 0x4, fixed_abs, tag = 'smem constant byte address 0x4 - core index']
  #allocation1 [shape = 'u32[72,128]{1,0:T(1,128)}', space=vmem, size = 0x9000, scoped, tag = 'internal scratch']
  %s0 = inlined_call_operand.vmem [shape: f32[8,128], index: 0, kind: input, shape index: {}]
  %s1 = inlined_call_operand.vmem [shape: bf16[128,1024], index: 1, kind: input, shape index: {}]
  %s2 = inlined_call_operand.vmem [shape: f32[1,1024], index: 2, kind: input, shape index: {}]
  %s3 = inlined_call_operand.vmem [shape: bf16[1024,64], index: 3, kind: input, shape index: {}]
  %s4 = inlined_call_operand.vmem [shape: f32[1,64], index: 4, kind: input, shape index: {}]
  %s5 = inlined_call_operand.hbm [shape: f32[8,64], index: 5, kind: output, shape index: {}]
  %s6 = sld [smem:[#allocation0]]
  $region30: #{tpu_custom_call.1} parent=0
    _
  %s8 = ssub.s32 1, %s6
  %s9 = scalar_select 0, %s8, %s6
  $region1: #{tpu_custom_call.1} parent=0
    #allocation2 [shape = 'u8[4096]{0}', space=vmem, size = 0x1000, scoped, tag = 'output window, operand 0, single buffered']
    #allocation3 [shape = 's32[1]{0}', space=sflag, size = 0x4, scoped, tag = 'scoped memory for tpu_custom_call.1']
    %10 = vsyncpa [#allocation3], 0
    // Predicated region
    $region2: #{tpu_custom_call.1} parent=1 // pred_check
      _
    $region3: #{tpu_custom_call.1} parent=1 // pred_check_branch
      %12 = sbr.rel (0) target = $region5
    $region4: #{tpu_custom_call.1} parent=1 // pred_region
      _
    $region5: #{tpu_custom_call.1} parent=1 // pred_fallthru
      _
    // Predicated region
    $region6: #{tpu_custom_call.1} parent=1 // pred_check
      _
    $region7: #{tpu_custom_call.1} parent=1 // pred_check_branch
      %14 = sbr.rel (0) target = $region9
    $region8: #{tpu_custom_call.1} parent=1 // pred_region
      _
    $region9: #{tpu_custom_call.1} parent=1 // pred_fallthru
      _
    // Predicated region
    $region10: #{tpu_custom_call.1} parent=1 // pred_check
      _
    $region11: #{tpu_custom_call.1} parent=1 // pred_check_branch
      %16 = sbr.rel (0) target = $region13
    $region12: #{tpu_custom_call.1} parent=1 // pred_region
      _
    $region13: #{tpu_custom_call.1} parent=1 // pred_fallthru
      _
    // Predicated region
    $region14: #{tpu_custom_call.1} parent=1 // pred_check
      _
    $region15: #{tpu_custom_call.1} parent=1 // pred_check_branch
      %18 = sbr.rel (0) target = $region17
    $region16: #{tpu_custom_call.1} parent=1 // pred_region
      _
    $region17: #{tpu_custom_call.1} parent=1 // pred_fallthru
      _
    // Predicated region
    $region18: #{tpu_custom_call.1} parent=1 // pred_check
      _
    $region19: #{tpu_custom_call.1} parent=1 // pred_check_branch
      %20 = sbr.rel (0) target = $region21
    $region20: #{tpu_custom_call.1} parent=1 // pred_region
      _
    $region21: #{tpu_custom_call.1} parent=1 // pred_fallthru
      _
    %v21 = vld [vmem:[%s0] sm:$0xff]
    %v22 = vpack.c.bf16 %v21, %v21
    %v23 = vld [vmem:[%s1] sm:$0xff]
    %v24 = vld [vmem:[%s1 + $0x8] sm:$0xff]
    %v25 = vld [vmem:[%s1 + $0x10] sm:$0xff]
    %v26 = vld [vmem:[%s1 + $0x18] sm:$0xff]
    %v27 = vld [vmem:[%s1 + $0x20] sm:$0xff]
    %v28 = vld [vmem:[%s1 + $0x28] sm:$0xff]
    %v29 = vld [vmem:[%s1 + $0x30] sm:$0xff]
    %v30 = vld [vmem:[%s1 + $0x38] sm:$0xff]
    %v31 = vld [vmem:[%s1 + $0x40] sm:$0xff]
    %v32 = vld [vmem:[%s1 + $0x48] sm:$0xff]
    %v33 = vld [vmem:[%s1 + $0x50] sm:$0xff]
    %v34 = vld [vmem:[%s1 + $0x58] sm:$0xff]
    %v35 = vld [vmem:[%s1 + $0x60] sm:$0xff]
    %v36 = vld [vmem:[%s1 + $0x68] sm:$0xff]
    %v37 = vld [vmem:[%s1 + $0x70] sm:$0xff]
    %v38 = vld [vmem:[%s1 + $0x78] sm:$0xff]
    %v39 = vld [vmem:[%s1 + $0x80] sm:$0xff]
    %v40 = vld [vmem:[%s1 + $0x88] sm:$0xff]
    %v41 = vld [vmem:[%s1 + $0x90] sm:$0xff]
    %v42 = vld [vmem:[%s1 + $0x98] sm:$0xff]
    %v43 = vld [vmem:[%s1 + $0xa0] sm:$0xff]
    %v44 = vld [vmem:[%s1 + $0xa8] sm:$0xff]
    %v45 = vld [vmem:[%s1 + $0xb0] sm:$0xff]
    %v46 = vld [vmem:[%s1 + $0xb8] sm:$0xff]
    %v47 = vld [vmem:[%s1 + $0xc0] sm:$0xff]
    %v48 = vld [vmem:[%s1 + $0xc8] sm:$0xff]
    %v49 = vld [vmem:[%s1 + $0xd0] sm:$0xff]
    %v50 = vld [vmem:[%s1 + $0xd8] sm:$0xff]
    %v51 = vld [vmem:[%s1 + $0xe0] sm:$0xff]
    %v52 = vld [vmem:[%s1 + $0xe8] sm:$0xff]
    %v53 = vld [vmem:[%s1 + $0xf0] sm:$0xff]
    %v54 = vld [vmem:[%s1 + $0xf8] sm:$0xff]
    %v55 = vld [vmem:[%s1 + $0x100] sm:$0xff]
    %v56 = vld [vmem:[%s1 + $0x108] sm:$0xff]
    %v57 = vld [vmem:[%s1 + $0x110] sm:$0xff]
    %v58 = vld [vmem:[%s1 + $0x118] sm:$0xff]
    %v59 = vld [vmem:[%s1 + $0x120] sm:$0xff]
    %v60 = vld [vmem:[%s1 + $0x128] sm:$0xff]
    %v61 = vld [vmem:[%s1 + $0x130] sm:$0xff]
    %v62 = vld [vmem:[%s1 + $0x138] sm:$0xff]
    %v63 = vld [vmem:[%s1 + $0x140] sm:$0xff]
    %v64 = vld [vmem:[%s1 + $0x148] sm:$0xff]
    %v65 = vld [vmem:[%s1 + $0x150] sm:$0xff]
    %v66 = vld [vmem:[%s1 + $0x158] sm:$0xff]
    %v67 = vld [vmem:[%s1 + $0x160] sm:$0xff]
    %v68 = vld [vmem:[%s1 + $0x168] sm:$0xff]
    %v69 = vld [vmem:[%s1 + $0x170] sm:$0xff]
    %v70 = vld [vmem:[%s1 + $0x178] sm:$0xff]
    %v71 = vld [vmem:[%s1 + $0x180] sm:$0xff]
    %v72 = vld [vmem:[%s1 + $0x188] sm:$0xff]
    %v73 = vld [vmem:[%s1 + $0x190] sm:$0xff]
    %v74 = vld [vmem:[%s1 + $0x198] sm:$0xff]
    %v75 = vld [vmem:[%s1 + $0x1a0] sm:$0xff]
    %v76 = vld [vmem:[%s1 + $0x1a8] sm:$0xff]
    %v77 = vld [vmem:[%s1 + $0x1b0] sm:$0xff]
    %v78 = vld [vmem:[%s1 + $0x1b8] sm:$0xff]
    %v79 = vld [vmem:[%s1 + $0x1c0] sm:$0xff]
    %v80 = vld [vmem:[%s1 + $0x1c8] sm:$0xff]
    %v81 = vld [vmem:[%s1 + $0x1d0] sm:$0xff]
    %v82 = vld [vmem:[%s1 + $0x1d8] sm:$0xff]
    %v83 = vld [vmem:[%s1 + $0x1e0] sm:$0xff]
    %v84 = vld [vmem:[%s1 + $0x1e8] sm:$0xff]
    %v85 = vld [vmem:[%s1 + $0x1f0] sm:$0xff]
    %v86 = vld [vmem:[%s1 + $0x1f8] sm:$0xff]
    %v87 = vld [vmem:[%s2] sm:$0xff]
    %v89 = vperm.slane %v87, 0
    %v90 = vperm.slane %v87, 1
    %v91 = vperm.slane %v87, 2
    %v92 = vperm.slane %v87, 3
    %v93 = vperm.slane %v87, 4
    %v94 = vperm.slane %v87, 5
    %v95 = vperm.slane %v87, 6
    %v96 = vperm.slane %v87, 7
    %v169 = vunpack.c.l.b16 %v23
    %v170 = vunpack.c.h.b16 %v23
    %v171 = vunpack.c.l.b16 %v24
    %v172 = vunpack.c.h.b16 %v24
    %v173 = vunpack.c.l.b16 %v25
    %v174 = vunpack.c.h.b16 %v25
    %v175 = vunpack.c.l.b16 %v26
    %v176 = vunpack.c.h.b16 %v26
    %v177 = vunpack.c.l.b16 %v27
    %v178 = vunpack.c.h.b16 %v27
    %v179 = vunpack.c.l.b16 %v28
    %v180 = vunpack.c.h.b16 %v28
    %v181 = vunpack.c.l.b16 %v29
    %v182 = vunpack.c.h.b16 %v29
    %v183 = vunpack.c.l.b16 %v30
    %v184 = vunpack.c.h.b16 %v30
    %v185 = vunpack.c.l.b16 %v31
    %v186 = vunpack.c.h.b16 %v31
    %v187 = vunpack.c.l.b16 %v32
    %v188 = vunpack.c.h.b16 %v32
    %v189 = vunpack.c.l.b16 %v33
    %v190 = vunpack.c.h.b16 %v33
    %v191 = vunpack.c.l.b16 %v34
    %v192 = vunpack.c.h.b16 %v34
    %v193 = vunpack.c.l.b16 %v35
    %v194 = vunpack.c.h.b16 %v35
    %v195 = vunpack.c.l.b16 %v36
    %v196 = vunpack.c.h.b16 %v36
    %v197 = vunpack.c.l.b16 %v37
    %v198 = vunpack.c.h.b16 %v37
    %v199 = vunpack.c.l.b16 %v38
    %v200 = vunpack.c.h.b16 %v38
    %v201 = vunpack.c.l.b16 %v39
    %v202 = vunpack.c.h.b16 %v39
    %v203 = vunpack.c.l.b16 %v40
    %v204 = vunpack.c.h.b16 %v40
    %v205 = vunpack.c.l.b16 %v41
    %v206 = vunpack.c.h.b16 %v41
    %v207 = vunpack.c.l.b16 %v42
    %v208 = vunpack.c.h.b16 %v42
    %v209 = vunpack.c.l.b16 %v43
    %v210 = vunpack.c.h.b16 %v43
    %v211 = vunpack.c.l.b16 %v44
    %v212 = vunpack.c.h.b16 %v44
    %v213 = vunpack.c.l.b16 %v45
    %v214 = vunpack.c.h.b16 %v45
    %v215 = vunpack.c.l.b16 %v46
    %v216 = vunpack.c.h.b16 %v46
    %v217 = vunpack.c.l.b16 %v47
    %v218 = vunpack.c.h.b16 %v47
    %v219 = vunpack.c.l.b16 %v48
    %v220 = vunpack.c.h.b16 %v48
    %v221 = vunpack.c.l.b16 %v49
    %v222 = vunpack.c.h.b16 %v49
    %v223 = vunpack.c.l.b16 %v50
    %v224 = vunpack.c.h.b16 %v50
    %v225 = vunpack.c.l.b16 %v51
    %v226 = vunpack.c.h.b16 %v51
    %v227 = vunpack.c.l.b16 %v52
    %v228 = vunpack.c.h.b16 %v52
    %v229 = vunpack.c.l.b16 %v53
    %v230 = vunpack.c.h.b16 %v53
    %v231 = vunpack.c.l.b16 %v54
    %v232 = vunpack.c.h.b16 %v54
    %v233 = vunpack.c.l.b16 %v55
    %v234 = vunpack.c.h.b16 %v55
    %v235 = vunpack.c.l.b16 %v56
    %v236 = vunpack.c.h.b16 %v56
    %v237 = vunpack.c.l.b16 %v57
    %v238 = vunpack.c.h.b16 %v57
    %v239 = vunpack.c.l.b16 %v58
    %v240 = vunpack.c.h.b16 %v58
    %v241 = vunpack.c.l.b16 %v59
    %v242 = vunpack.c.h.b16 %v59
    %v243 = vunpack.c.l.b16 %v60
    %v244 = vunpack.c.h.b16 %v60
    %v245 = vunpack.c.l.b16 %v61
    %v246 = vunpack.c.h.b16 %v61
    %v247 = vunpack.c.l.b16 %v62
    %v248 = vunpack.c.h.b16 %v62
    %v249 = vunpack.c.l.b16 %v63
    %v250 = vunpack.c.h.b16 %v63
    %v251 = vunpack.c.l.b16 %v64
    %v252 = vunpack.c.h.b16 %v64
    %v253 = vunpack.c.l.b16 %v65
    %v254 = vunpack.c.h.b16 %v65
    %v255 = vunpack.c.l.b16 %v66
    %v256 = vunpack.c.h.b16 %v66
    %v257 = vunpack.c.l.b16 %v67
    %v258 = vunpack.c.h.b16 %v67
    %v259 = vunpack.c.l.b16 %v68
    %v260 = vunpack.c.h.b16 %v68
    %v261 = vunpack.c.l.b16 %v69
    %v262 = vunpack.c.h.b16 %v69
    %v263 = vunpack.c.l.b16 %v70
    %v264 = vunpack.c.h.b16 %v70
    %v265 = vunpack.c.l.b16 %v71
    %v266 = vunpack.c.h.b16 %v71
    %v267 = vunpack.c.l.b16 %v72
    %v268 = vunpack.c.h.b16 %v72
    %v269 = vunpack.c.l.b16 %v73
    %v270 = vunpack.c.h.b16 %v73
    %v271 = vunpack.c.l.b16 %v74
    %v272 = vunpack.c.h.b16 %v74
    %v273 = vunpack.c.l.b16 %v75
    %v274 = vunpack.c.h.b16 %v75
    %v275 = vunpack.c.l.b16 %v76
    %v276 = vunpack.c.h.b16 %v76
    %v277 = vunpack.c.l.b16 %v77
    %v278 = vunpack.c.h.b16 %v77
    %v279 = vunpack.c.l.b16 %v78
    %v280 = vunpack.c.h.b16 %v78
    %v281 = vunpack.c.l.b16 %v79
    %v282 = vunpack.c.h.b16 %v79
    %v283 = vunpack.c.l.b16 %v80
    %v284 = vunpack.c.h.b16 %v80
    %v285 = vunpack.c.l.b16 %v81
    %v286 = vunpack.c.h.b16 %v81
    %v287 = vunpack.c.l.b16 %v82
    %v288 = vunpack.c.h.b16 %v82
    %v289 = vunpack.c.l.b16 %v83
    %v290 = vunpack.c.h.b16 %v83
    %v291 = vunpack.c.l.b16 %v84
    %v292 = vunpack.c.h.b16 %v84
    %v293 = vunpack.c.l.b16 %v85
    %v294 = vunpack.c.h.b16 %v85
    %v295 = vunpack.c.l.b16 %v86
    %v296 = vunpack.c.h.b16 %v86
    %v297 = vpack.c.b16 %v177, %v169
    %v298 = vpack.c.b16 %v178, %v170
    %v299 = vpack.c.b16 %v179, %v171
    %v300 = vpack.c.b16 %v180, %v172
    %v301 = vpack.c.b16 %v181, %v173
    %v302 = vpack.c.b16 %v182, %v174
    %v303 = vpack.c.b16 %v183, %v175
    %v304 = vpack.c.b16 %v184, %v176
    %v305 = vpack.c.b16 %v193, %v185
    %v306 = vpack.c.b16 %v194, %v186
    %v307 = vpack.c.b16 %v195, %v187
    %v308 = vpack.c.b16 %v196, %v188
    %v309 = vpack.c.b16 %v197, %v189
    %v310 = vpack.c.b16 %v198, %v190
    %v311 = vpack.c.b16 %v199, %v191
    %v312 = vpack.c.b16 %v200, %v192
    %v313 = vpack.c.b16 %v209, %v201
    %v314 = vpack.c.b16 %v210, %v202
    %v315 = vpack.c.b16 %v211, %v203
    %v316 = vpack.c.b16 %v212, %v204
    %v317 = vpack.c.b16 %v213, %v205
    %v318 = vpack.c.b16 %v214, %v206
    %v319 = vpack.c.b16 %v215, %v207
    %v320 = vpack.c.b16 %v216, %v208
    %v321 = vpack.c.b16 %v225, %v217
    %v322 = vpack.c.b16 %v226, %v218
    %v323 = vpack.c.b16 %v227, %v219
    %v324 = vpack.c.b16 %v228, %v220
    %v325 = vpack.c.b16 %v229, %v221
    %v326 = vpack.c.b16 %v230, %v222
    %v327 = vpack.c.b16 %v231, %v223
    %v328 = vpack.c.b16 %v232, %v224
    %v329 = vpack.c.b16 %v241, %v233
    %v330 = vpack.c.b16 %v242, %v234
    %v331 = vpack.c.b16 %v243, %v235
    %v332 = vpack.c.b16 %v244, %v236
    %v333 = vpack.c.b16 %v245, %v237
    %v334 = vpack.c.b16 %v246, %v238
    %v335 = vpack.c.b16 %v247, %v239
    %v336 = vpack.c.b16 %v248, %v240
    %v337 = vpack.c.b16 %v257, %v249
    %v338 = vpack.c.b16 %v258, %v250
    %v339 = vpack.c.b16 %v259, %v251
    %v340 = vpack.c.b16 %v260, %v252
    %v341 = vpack.c.b16 %v261, %v253
    %v342 = vpack.c.b16 %v262, %v254
    %v343 = vpack.c.b16 %v263, %v255
    %v344 = vpack.c.b16 %v264, %v256
    %v345 = vpack.c.b16 %v273, %v265
    %v346 = vpack.c.b16 %v274, %v266
    %v347 = vpack.c.b16 %v275, %v267
    %v348 = vpack.c.b16 %v276, %v268
    %v349 = vpack.c.b16 %v277, %v269
    %v350 = vpack.c.b16 %v278, %v270
    %v351 = vpack.c.b16 %v279, %v271
    %v352 = vpack.c.b16 %v280, %v272
    %v353 = vpack.c.b16 %v289, %v281
    %v354 = vpack.c.b16 %v290, %v282
    %v355 = vpack.c.b16 %v291, %v283
    %v356 = vpack.c.b16 %v292, %v284
    %v357 = vpack.c.b16 %v293, %v285
    %v358 = vpack.c.b16 %v294, %v286
    %v359 = vpack.c.b16 %v295, %v287
    %v360 = vpack.c.b16 %v296, %v288
    %425 = vmatpush.bf16.msra.mxu0 %v353
    %426 = vmatpush.bf16.msra.mxu0 %v345
    %427 = vmatpush.bf16.msra.mxu0 %v337
    %428 = vmatpush.bf16.msra.mxu0 %v329
    %429 = vmatpush.bf16.msra.mxu0 %v321
    %430 = vmatpush.bf16.msra.mxu0 %v313
    %431 = vmatpush.bf16.msra.mxu0 %v305
    %432 = vmatpush.bf16.msra.mxu0 %v297
    %433 = vmatmul.bf16.gmra.mxu0 %v22
    %v434 = vpop.f32.mrf.mxu0
    %v435 = vadd.f32 %v89, %v434
    %v436 = vpop.f32.mrf.mxu0
    %437 = vdwg.mxu0
    %438 = vmatpush.bf16.msra.mxu0 %v354
    %439 = vmatpush.bf16.msra.mxu0 %v346
    %440 = vmatpush.bf16.msra.mxu0 %v338
    %441 = vmatpush.bf16.msra.mxu0 %v330
    %442 = vmatpush.bf16.msra.mxu0 %v322
    %443 = vmatpush.bf16.msra.mxu0 %v314
    %444 = vmatpush.bf16.msra.mxu0 %v306
    %445 = vmatpush.bf16.msra.mxu0 %v298
    %446 = vmatmul.bf16.gmra.mxu0 %v22
    %v447 = vpop.f32.mrf.mxu0
    %v448 = vadd.f32 %v90, %v447
    %v449 = vpop.f32.mrf.mxu0
    %450 = vdwg.mxu0
    %451 = vmatpush.bf16.msra.mxu0 %v355
    %452 = vmatpush.bf16.msra.mxu0 %v347
    %453 = vmatpush.bf16.msra.mxu0 %v339
    %454 = vmatpush.bf16.msra.mxu0 %v331
    %455 = vmatpush.bf16.msra.mxu0 %v323
    %456 = vmatpush.bf16.msra.mxu0 %v315
    %457 = vmatpush.bf16.msra.mxu0 %v307
    %458 = vmatpush.bf16.msra.mxu0 %v299
    %459 = vmatmul.bf16.gmra.mxu0 %v22
    %v460 = vpop.f32.mrf.mxu0
    %v461 = vadd.f32 %v91, %v460
    %v462 = vpop.f32.mrf.mxu0
    %463 = vdwg.mxu0
    %464 = vmatpush.bf16.msra.mxu0 %v356
    %465 = vmatpush.bf16.msra.mxu0 %v348
    %466 = vmatpush.bf16.msra.mxu0 %v340
    %467 = vmatpush.bf16.msra.mxu0 %v332
    %468 = vmatpush.bf16.msra.mxu0 %v324
    %469 = vmatpush.bf16.msra.mxu0 %v316
    %470 = vmatpush.bf16.msra.mxu0 %v308
    %471 = vmatpush.bf16.msra.mxu0 %v300
    %472 = vmatmul.bf16.gmra.mxu0 %v22
    %v473 = vpop.f32.mrf.mxu0
    %v474 = vadd.f32 %v92, %v473
    %v475 = vpop.f32.mrf.mxu0
    %476 = vdwg.mxu0
    %477 = vmatpush.bf16.msra.mxu0 %v357
    %478 = vmatpush.bf16.msra.mxu0 %v349
    %479 = vmatpush.bf16.msra.mxu0 %v341
    %480 = vmatpush.bf16.msra.mxu0 %v333
    %481 = vmatpush.bf16.msra.mxu0 %v325
    %482 = vmatpush.bf16.msra.mxu0 %v317
    %483 = vmatpush.bf16.msra.mxu0 %v309
    %484 = vmatpush.bf16.msra.mxu0 %v301
    %485 = vmatmul.bf16.gmra.mxu0 %v22
    %v486 = vpop.f32.mrf.mxu0
    %v487 = vadd.f32 %v93, %v486
    %v488 = vpop.f32.mrf.mxu0
    %489 = vdwg.mxu0
    %490 = vmatpush.bf16.msra.mxu0 %v358
    %491 = vmatpush.bf16.msra.mxu0 %v350
    %492 = vmatpush.bf16.msra.mxu0 %v342
    %493 = vmatpush.bf16.msra.mxu0 %v334
    %494 = vmatpush.bf16.msra.mxu0 %v326
    %495 = vmatpush.bf16.msra.mxu0 %v318
    %496 = vmatpush.bf16.msra.mxu0 %v310
    %497 = vmatpush.bf16.msra.mxu0 %v302
    %498 = vmatmul.bf16.gmra.mxu0 %v22
    %v499 = vpop.f32.mrf.mxu0
    %v500 = vadd.f32 %v94, %v499
    %v501 = vpop.f32.mrf.mxu0
    %502 = vdwg.mxu0
    %503 = vmatpush.bf16.msra.mxu0 %v359
    %504 = vmatpush.bf16.msra.mxu0 %v351
    %505 = vmatpush.bf16.msra.mxu0 %v343
    %506 = vmatpush.bf16.msra.mxu0 %v335
    %507 = vmatpush.bf16.msra.mxu0 %v327
    %508 = vmatpush.bf16.msra.mxu0 %v319
    %509 = vmatpush.bf16.msra.mxu0 %v311
    %510 = vmatpush.bf16.msra.mxu0 %v303
    %511 = vmatmul.bf16.gmra.mxu0 %v22
    %v512 = vpop.f32.mrf.mxu0
    %v513 = vadd.f32 %v95, %v512
    %v514 = vpop.f32.mrf.mxu0
    %515 = vdwg.mxu0
    %516 = vmatpush.bf16.msra.mxu0 %v360
    %517 = vmatpush.bf16.msra.mxu0 %v352
    %518 = vmatpush.bf16.msra.mxu0 %v344
    %519 = vmatpush.bf16.msra.mxu0 %v336
    %520 = vmatpush.bf16.msra.mxu0 %v328
    %521 = vmatpush.bf16.msra.mxu0 %v320
    %522 = vmatpush.bf16.msra.mxu0 %v312
    %523 = vmatpush.bf16.msra.mxu0 %v304
    %524 = vmatmul.bf16.gmra.mxu0 %v22
    %v525 = vpop.f32.mrf.mxu0
    %v526 = vadd.f32 %v96, %v525
    %v527 = vpop.f32.mrf.mxu0
    %528 = vdwg.mxu0
    %v529 = vmax.f32 %v435, 0.0
    %v530 = vmax.f32 %v448, 0.0
    %v531 = vmax.f32 %v461, 0.0
    %v532 = vmax.f32 %v474, 0.0
    %v533 = vmax.f32 %v487, 0.0
    %v534 = vmax.f32 %v500, 0.0
    %v535 = vmax.f32 %v513, 0.0
    %v536 = vmax.f32 %v526, 0.0
    %v537 = vpack.c.bf16 %v529, %v529
    %v538 = vpack.c.bf16 %v530, %v530
    %v539 = vpack.c.bf16 %v531, %v531
    %v540 = vpack.c.bf16 %v532, %v532
    %v541 = vpack.c.bf16 %v533, %v533
    %v542 = vpack.c.bf16 %v534, %v534
    %v543 = vpack.c.bf16 %v535, %v535
    %v544 = vpack.c.bf16 %v536, %v536
    %v545 = vld [vmem:[%s3] sm:$0xf]
    %v546 = vld [vmem:[%s3 + $0x4] sm:$0xf]
    %v547 = vld [vmem:[%s3 + $0x8] sm:$0xf]
    %v548 = vld [vmem:[%s3 + $0xc] sm:$0xf]
    %v549 = vld [vmem:[%s3 + $0x10] sm:$0xf]
    %v550 = vld [vmem:[%s3 + $0x14] sm:$0xf]
    %v551 = vld [vmem:[%s3 + $0x18] sm:$0xf]
    %v552 = vld [vmem:[%s3 + $0x1c] sm:$0xf]
    %v553 = vld [vmem:[%s3 + $0x20] sm:$0xf]
    %v554 = vld [vmem:[%s3 + $0x24] sm:$0xf]
    %v555 = vld [vmem:[%s3 + $0x28] sm:$0xf]
    %v556 = vld [vmem:[%s3 + $0x2c] sm:$0xf]
    %v557 = vld [vmem:[%s3 + $0x30] sm:$0xf]
    %v558 = vld [vmem:[%s3 + $0x34] sm:$0xf]
    %v559 = vld [vmem:[%s3 + $0x38] sm:$0xf]
    %v560 = vld [vmem:[%s3 + $0x3c] sm:$0xf]
    %v561 = vld [vmem:[%s3 + $0x40] sm:$0xf]
    %v562 = vld [vmem:[%s3 + $0x44] sm:$0xf]
    %v563 = vld [vmem:[%s3 + $0x48] sm:$0xf]
    %v564 = vld [vmem:[%s3 + $0x4c] sm:$0xf]
    %v565 = vld [vmem:[%s3 + $0x50] sm:$0xf]
    %v566 = vld [vmem:[%s3 + $0x54] sm:$0xf]
    %v567 = vld [vmem:[%s3 + $0x58] sm:$0xf]
    %v568 = vld [vmem:[%s3 + $0x5c] sm:$0xf]
    %v569 = vld [vmem:[%s3 + $0x60] sm:$0xf]
    %v570 = vld [vmem:[%s3 + $0x64] sm:$0xf]
    %v571 = vld [vmem:[%s3 + $0x68] sm:$0xf]
    %v572 = vld [vmem:[%s3 + $0x6c] sm:$0xf]
    %v573 = vld [vmem:[%s3 + $0x70] sm:$0xf]
    %v574 = vld [vmem:[%s3 + $0x74] sm:$0xf]
    %v575 = vld [vmem:[%s3 + $0x78] sm:$0xf]
    %v576 = vld [vmem:[%s3 + $0x7c] sm:$0xf]
    %v577 = vld [vmem:[%s3 + $0x80] sm:$0xf]
    %v578 = vld [vmem:[%s3 + $0x84] sm:$0xf]
    %v579 = vld [vmem:[%s3 + $0x88] sm:$0xf]
    %v580 = vld [vmem:[%s3 + $0x8c] sm:$0xf]
    %v581 = vld [vmem:[%s3 + $0x90] sm:$0xf]
    %v582 = vld [vmem:[%s3 + $0x94] sm:$0xf]
    %v583 = vld [vmem:[%s3 + $0x98] sm:$0xf]
    %v584 = vld [vmem:[%s3 + $0x9c] sm:$0xf]
    %v585 = vld [vmem:[%s3 + $0xa0] sm:$0xf]
    %v586 = vld [vmem:[%s3 + $0xa4] sm:$0xf]
    %v587 = vld [vmem:[%s3 + $0xa8] sm:$0xf]
    %v588 = vld [vmem:[%s3 + $0xac] sm:$0xf]
    %v589 = vld [vmem:[%s3 + $0xb0] sm:$0xf]
    %v590 = vld [vmem:[%s3 + $0xb4] sm:$0xf]
    %v591 = vld [vmem:[%s3 + $0xb8] sm:$0xf]
    %v592 = vld [vmem:[%s3 + $0xbc] sm:$0xf]
    %v593 = vld [vmem:[%s3 + $0xc0] sm:$0xf]
    %v594 = vld [vmem:[%s3 + $0xc4] sm:$0xf]
    %v595 = vld [vmem:[%s3 + $0xc8] sm:$0xf]
    %v596 = vld [vmem:[%s3 + $0xcc] sm:$0xf]
    %v597 = vld [vmem:[%s3 + $0xd0] sm:$0xf]
    %v598 = vld [vmem:[%s3 + $0xd4] sm:$0xf]
    %v599 = vld [vmem:[%s3 + $0xd8] sm:$0xf]
    %v600 = vld [vmem:[%s3 + $0xdc] sm:$0xf]
    %v601 = vld [vmem:[%s3 + $0xe0] sm:$0xf]
    %v602 = vld [vmem:[%s3 + $0xe4] sm:$0xf]
    %v603 = vld [vmem:[%s3 + $0xe8] sm:$0xf]
    %v604 = vld [vmem:[%s3 + $0xec] sm:$0xf]
    %v605 = vld [vmem:[%s3 + $0xf0] sm:$0xf]
    %v606 = vld [vmem:[%s3 + $0xf4] sm:$0xf]
    %v607 = vld [vmem:[%s3 + $0xf8] sm:$0xf]
    %v608 = vld [vmem:[%s3 + $0xfc] sm:$0xf]
    %v609 = vld [vmem:[%s3 + $0x100] sm:$0xf]
    %v610 = vld [vmem:[%s3 + $0x104] sm:$0xf]
    %v611 = vld [vmem:[%s3 + $0x108] sm:$0xf]
    %v612 = vld [vmem:[%s3 + $0x10c] sm:$0xf]
    %v613 = vld [vmem:[%s3 + $0x110] sm:$0xf]
    %v614 = vld [vmem:[%s3 + $0x114] sm:$0xf]
    %v615 = vld [vmem:[%s3 + $0x118] sm:$0xf]
    %v616 = vld [vmem:[%s3 + $0x11c] sm:$0xf]
    %v617 = vld [vmem:[%s3 + $0x120] sm:$0xf]
    %v618 = vld [vmem:[%s3 + $0x124] sm:$0xf]
    %v619 = vld [vmem:[%s3 + $0x128] sm:$0xf]
    %v620 = vld [vmem:[%s3 + $0x12c] sm:$0xf]
    %v621 = vld [vmem:[%s3 + $0x130] sm:$0xf]
    %v622 = vld [vmem:[%s3 + $0x134] sm:$0xf]
    %v623 = vld [vmem:[%s3 + $0x138] sm:$0xf]
    %v624 = vld [vmem:[%s3 + $0x13c] sm:$0xf]
    %v625 = vld [vmem:[%s3 + $0x140] sm:$0xf]
    %v626 = vld [vmem:[%s3 + $0x144] sm:$0xf]
    %v627 = vld [vmem:[%s3 + $0x148] sm:$0xf]
    %v628 = vld [vmem:[%s3 + $0x14c] sm:$0xf]
    %v629 = vld [vmem:[%s3 + $0x150] sm:$0xf]
    %v630 = vld [vmem:[%s3 + $0x154] sm:$0xf]
    %v631 = vld [vmem:[%s3 + $0x158] sm:$0xf]
    %v632 = vld [vmem:[%s3 + $0x15c] sm:$0xf]
    %v633 = vld [vmem:[%s3 + $0x160] sm:$0xf]
    %v634 = vld [vmem:[%s3 + $0x164] sm:$0xf]
    %v635 = vld [vmem:[%s3 + $0x168] sm:$0xf]
    %v636 = vld [vmem:[%s3 + $0x16c] sm:$0xf]
    %v637 = vld [vmem:[%s3 + $0x170] sm:$0xf]
    %v638 = vld [vmem:[%s3 + $0x174] sm:$0xf]
    %v639 = vld [vmem:[%s3 + $0x178] sm:$0xf]
    %v640 = vld [vmem:[%s3 + $0x17c] sm:$0xf]
    %v641 = vld [vmem:[%s3 + $0x180] sm:$0xf]
    %v642 = vld [vmem:[%s3 + $0x184] sm:$0xf]
    %v643 = vld [vmem:[%s3 + $0x188] sm:$0xf]
    %v644 = vld [vmem:[%s3 + $0x18c] sm:$0xf]
    %v645 = vld [vmem:[%s3 + $0x190] sm:$0xf]
    %v646 = vld [vmem:[%s3 + $0x194] sm:$0xf]
    %v647 = vld [vmem:[%s3 + $0x198] sm:$0xf]
    %v648 = vld [vmem:[%s3 + $0x19c] sm:$0xf]
    %v649 = vld [vmem:[%s3 + $0x1a0] sm:$0xf]
    %v650 = vld [vmem:[%s3 + $0x1a4] sm:$0xf]
    %v651 = vld [vmem:[%s3 + $0x1a8] sm:$0xf]
    %v652 = vld [vmem:[%s3 + $0x1ac] sm:$0xf]
    %v653 = vld [vmem:[%s3 + $0x1b0] sm:$0xf]
    %v654 = vld [vmem:[%s3 + $0x1b4] sm:$0xf]
    %v655 = vld [vmem:[%s3 + $0x1b8] sm:$0xf]
    %v656 = vld [vmem:[%s3 + $0x1bc] sm:$0xf]
    %v657 = vld [vmem:[%s3 + $0x1c0] sm:$0xf]
    %v658 = vld [vmem:[%s3 + $0x1c4] sm:$0xf]
    %v659 = vld [vmem:[%s3 + $0x1c8] sm:$0xf]
    %v660 = vld [vmem:[%s3 + $0x1cc] sm:$0xf]
    %v661 = vld [vmem:[%s3 + $0x1d0] sm:$0xf]
    %v662 = vld [vmem:[%s3 + $0x1d4] sm:$0xf]
    %v663 = vld [vmem:[%s3 + $0x1d8] sm:$0xf]
    %v664 = vld [vmem:[%s3 + $0x1dc] sm:$0xf]
    %v665 = vld [vmem:[%s3 + $0x1e0] sm:$0xf]
    %v666 = vld [vmem:[%s3 + $0x1e4] sm:$0xf]
    %v667 = vld [vmem:[%s3 + $0x1e8] sm:$0xf]
    %v668 = vld [vmem:[%s3 + $0x1ec] sm:$0xf]
    %v669 = vld [vmem:[%s3 + $0x1f0] sm:$0xf]
    %v670 = vld [vmem:[%s3 + $0x1f4] sm:$0xf]
    %v671 = vld [vmem:[%s3 + $0x1f8] sm:$0xf]
    %v672 = vld [vmem:[%s3 + $0x1fc] sm:$0xf]
    %v673 = vld [vmem:[%s4] sm:$0x1]
    %v675 = vperm.slane %v673, 0
    %v805 = vunpack.c.l.b16 %v545
    %v806 = vunpack.c.l.b16 %v546
    %v807 = vunpack.c.l.b16 %v547
    %v808 = vunpack.c.l.b16 %v548
    %v809 = vunpack.c.l.b16 %v549
    %v810 = vunpack.c.l.b16 %v550
    %v811 = vunpack.c.l.b16 %v551
    %v812 = vunpack.c.l.b16 %v552
    %v813 = vunpack.c.l.b16 %v553
    %v814 = vunpack.c.l.b16 %v554
    %v815 = vunpack.c.l.b16 %v555
    %v816 = vunpack.c.l.b16 %v556
    %v817 = vunpack.c.l.b16 %v557
    %v818 = vunpack.c.l.b16 %v558
    %v819 = vunpack.c.l.b16 %v559
    %v820 = vunpack.c.l.b16 %v560
    %v821 = vunpack.c.l.b16 %v561
    %v822 = vunpack.c.l.b16 %v562
    %v823 = vunpack.c.l.b16 %v563
    %v824 = vunpack.c.l.b16 %v564
    %v825 = vunpack.c.l.b16 %v565
    %v826 = vunpack.c.l.b16 %v566
    %v827 = vunpack.c.l.b16 %v567
    %v828 = vunpack.c.l.b16 %v568
    %v829 = vunpack.c.l.b16 %v569
    %v830 = vunpack.c.l.b16 %v570
    %v831 = vunpack.c.l.b16 %v571
    %v832 = vunpack.c.l.b16 %v572
    %v833 = vunpack.c.l.b16 %v573
    %v834 = vunpack.c.l.b16 %v574
    %v835 = vunpack.c.l.b16 %v575
    %v836 = vunpack.c.l.b16 %v576
    %v837 = vunpack.c.l.b16 %v577
    %v838 = vunpack.c.l.b16 %v578
    %v839 = vunpack.c.l.b16 %v579
    %v840 = vunpack.c.l.b16 %v580
    %v841 = vunpack.c.l.b16 %v581
    %v842 = vunpack.c.l.b16 %v582
    %v843 = vunpack.c.l.b16 %v583
    %v844 = vunpack.c.l.b16 %v584
    %v845 = vunpack.c.l.b16 %v585
    %v846 = vunpack.c.l.b16 %v586
    %v847 = vunpack.c.l.b16 %v587
    %v848 = vunpack.c.l.b16 %v588
    %v849 = vunpack.c.l.b16 %v589
    %v850 = vunpack.c.l.b16 %v590
    %v851 = vunpack.c.l.b16 %v591
    %v852 = vunpack.c.l.b16 %v592
    %v853 = vunpack.c.l.b16 %v593
    %v854 = vunpack.c.l.b16 %v594
    %v855 = vunpack.c.l.b16 %v595
    %v856 = vunpack.c.l.b16 %v596
    %v857 = vunpack.c.l.b16 %v597
    %v858 = vunpack.c.l.b16 %v598
    %v859 = vunpack.c.l.b16 %v599
    %v860 = vunpack.c.l.b16 %v600
    %v861 = vunpack.c.l.b16 %v601
    %v862 = vunpack.c.l.b16 %v602
    %v863 = vunpack.c.l.b16 %v603
    %v864 = vunpack.c.l.b16 %v604
    %v865 = vunpack.c.l.b16 %v605
    %v866 = vunpack.c.l.b16 %v606
    %v867 = vunpack.c.l.b16 %v607
    %v868 = vunpack.c.l.b16 %v608
    %v869 = vunpack.c.l.b16 %v609
    %v870 = vunpack.c.l.b16 %v610
    %v871 = vunpack.c.l.b16 %v611
    %v872 = vunpack.c.l.b16 %v612
    %v873 = vunpack.c.l.b16 %v613
    %v874 = vunpack.c.l.b16 %v614
    %v875 = vunpack.c.l.b16 %v615
    %v876 = vunpack.c.l.b16 %v616
    %v877 = vunpack.c.l.b16 %v617
    %v878 = vunpack.c.l.b16 %v618
    %v879 = vunpack.c.l.b16 %v619
    %v880 = vunpack.c.l.b16 %v620
    %v881 = vunpack.c.l.b16 %v621
    %v882 = vunpack.c.l.b16 %v622
    %v883 = vunpack.c.l.b16 %v623
    %v884 = vunpack.c.l.b16 %v624
    %v885 = vunpack.c.l.b16 %v625
    %v886 = vunpack.c.l.b16 %v626
    %v887 = vunpack.c.l.b16 %v627
    %v888 = vunpack.c.l.b16 %v628
    %v889 = vunpack.c.l.b16 %v629
    %v890 = vunpack.c.l.b16 %v630
    %v891 = vunpack.c.l.b16 %v631
    %v892 = vunpack.c.l.b16 %v632
    %v893 = vunpack.c.l.b16 %v633
    %v894 = vunpack.c.l.b16 %v634
    %v895 = vunpack.c.l.b16 %v635
    %v896 = vunpack.c.l.b16 %v636
    %v897 = vunpack.c.l.b16 %v637
    %v898 = vunpack.c.l.b16 %v638
    %v899 = vunpack.c.l.b16 %v639
    %v900 = vunpack.c.l.b16 %v640
    %v901 = vunpack.c.l.b16 %v641
    %v902 = vunpack.c.l.b16 %v642
    %v903 = vunpack.c.l.b16 %v643
    %v904 = vunpack.c.l.b16 %v644
    %v905 = vunpack.c.l.b16 %v645
    %v906 = vunpack.c.l.b16 %v646
    %v907 = vunpack.c.l.b16 %v647
    %v908 = vunpack.c.l.b16 %v648
    %v909 = vunpack.c.l.b16 %v649
    %v910 = vunpack.c.l.b16 %v650
    %v911 = vunpack.c.l.b16 %v651
    %v912 = vunpack.c.l.b16 %v652
    %v913 = vunpack.c.l.b16 %v653
    %v914 = vunpack.c.l.b16 %v654
    %v915 = vunpack.c.l.b16 %v655
    %v916 = vunpack.c.l.b16 %v656
    %v917 = vunpack.c.l.b16 %v657
    %v918 = vunpack.c.l.b16 %v658
    %v919 = vunpack.c.l.b16 %v659
    %v920 = vunpack.c.l.b16 %v660
    %v921 = vunpack.c.l.b16 %v661
    %v922 = vunpack.c.l.b16 %v662
    %v923 = vunpack.c.l.b16 %v663
    %v924 = vunpack.c.l.b16 %v664
    %v925 = vunpack.c.l.b16 %v665
    %v926 = vunpack.c.l.b16 %v666
    %v927 = vunpack.c.l.b16 %v667
    %v928 = vunpack.c.l.b16 %v668
    %v929 = vunpack.c.l.b16 %v669
    %v930 = vunpack.c.l.b16 %v670
    %v931 = vunpack.c.l.b16 %v671
    %v932 = vunpack.c.l.b16 %v672
    %v933 = vpack.c.b16 %v806, %v805
    %v934 = vpack.c.b16 %v808, %v807
    %v935 = vpack.c.b16 %v810, %v809
    %v936 = vpack.c.b16 %v812, %v811
    %v937 = vpack.c.b16 %v814, %v813
    %v938 = vpack.c.b16 %v816, %v815
    %v939 = vpack.c.b16 %v818, %v817
    %v940 = vpack.c.b16 %v820, %v819
    %v941 = vpack.c.b16 %v822, %v821
    %v942 = vpack.c.b16 %v824, %v823
    %v943 = vpack.c.b16 %v826, %v825
    %v944 = vpack.c.b16 %v828, %v827
    %v945 = vpack.c.b16 %v830, %v829
    %v946 = vpack.c.b16 %v832, %v831
    %v947 = vpack.c.b16 %v834, %v833
    %v948 = vpack.c.b16 %v836, %v835
    %v949 = vpack.c.b16 %v838, %v837
    %v950 = vpack.c.b16 %v840, %v839
    %v951 = vpack.c.b16 %v842, %v841
    %v952 = vpack.c.b16 %v844, %v843
    %v953 = vpack.c.b16 %v846, %v845
    %v954 = vpack.c.b16 %v848, %v847
    %v955 = vpack.c.b16 %v850, %v849
    %v956 = vpack.c.b16 %v852, %v851
    %v957 = vpack.c.b16 %v854, %v853
    %v958 = vpack.c.b16 %v856, %v855
    %v959 = vpack.c.b16 %v858, %v857
    %v960 = vpack.c.b16 %v860, %v859
    %v961 = vpack.c.b16 %v862, %v861
    %v962 = vpack.c.b16 %v864, %v863
    %v963 = vpack.c.b16 %v866, %v865
    %v964 = vpack.c.b16 %v868, %v867
    %v965 = vpack.c.b16 %v870, %v869
    %v966 = vpack.c.b16 %v872, %v871
    %v967 = vpack.c.b16 %v874, %v873
    %v968 = vpack.c.b16 %v876, %v875
    %v969 = vpack.c.b16 %v878, %v877
    %v970 = vpack.c.b16 %v880, %v879
    %v971 = vpack.c.b16 %v882, %v881
    %v972 = vpack.c.b16 %v884, %v883
    %v973 = vpack.c.b16 %v886, %v885
    %v974 = vpack.c.b16 %v888, %v887
    %v975 = vpack.c.b16 %v890, %v889
    %v976 = vpack.c.b16 %v892, %v891
    %v977 = vpack.c.b16 %v894, %v893
    %v978 = vpack.c.b16 %v896, %v895
    %v979 = vpack.c.b16 %v898, %v897
    %v980 = vpack.c.b16 %v900, %v899
    %v981 = vpack.c.b16 %v902, %v901
    %v982 = vpack.c.b16 %v904, %v903
    %v983 = vpack.c.b16 %v906, %v905
    %v984 = vpack.c.b16 %v908, %v907
    %v985 = vpack.c.b16 %v910, %v909
    %v986 = vpack.c.b16 %v912, %v911
    %v987 = vpack.c.b16 %v914, %v913
    %v988 = vpack.c.b16 %v916, %v915
    %v989 = vpack.c.b16 %v918, %v917
    %v990 = vpack.c.b16 %v920, %v919
    %v991 = vpack.c.b16 %v922, %v921
    %v992 = vpack.c.b16 %v924, %v923
    %v993 = vpack.c.b16 %v926, %v925
    %v994 = vpack.c.b16 %v928, %v927
    %v995 = vpack.c.b16 %v930, %v929
    %v996 = vpack.c.b16 %v932, %v931
    %1061 = vmatpush.bf16.msra.mxu0 %v940
    %1062 = vmatpush.bf16.msra.mxu0 %v939
    %1063 = vmatpush.bf16.msra.mxu0 %v938
    %1064 = vmatpush.bf16.msra.mxu0 %v937
    %1065 = vmatpush.bf16.msra.mxu0 %v936
    %1066 = vmatpush.bf16.msra.mxu0 %v935
    %1067 = vmatpush.bf16.msra.mxu0 %v934
    %1068 = vmatpush.bf16.msra.mxu0 %v933
    %1069 = vmatmul.bf16.gmra.mxu0 %v537
    %v1070 = vpop.f32.mrf.mxu0
    %v1071 = vadd.f32 %v675, %v1070
    %v1072 = vpop.f32.mrf.mxu0
    %1073 = vdwg.mxu0
    %1074 = vmatpush.bf16.msra.mxu0 %v948
    %1075 = vmatpush.bf16.msra.mxu0 %v947
    %1076 = vmatpush.bf16.msra.mxu0 %v946
    %1077 = vmatpush.bf16.msra.mxu0 %v945
    %1078 = vmatpush.bf16.msra.mxu0 %v944
    %1079 = vmatpush.bf16.msra.mxu0 %v943
    %1080 = vmatpush.bf16.msra.mxu0 %v942
    %1081 = vmatpush.bf16.msra.mxu0 %v941
    %1082 = vmatmul.bf16.gmra.mxu0 %v538
    %v1083 = vpop.f32.mrf.mxu0
    %v1084 = vadd.f32 %v1071, %v1083
    %v1085 = vpop.f32.mrf.mxu0
    %1086 = vdwg.mxu0
    %1087 = vmatpush.bf16.msra.mxu0 %v956
    %1088 = vmatpush.bf16.msra.mxu0 %v955
    %1089 = vmatpush.bf16.msra.mxu0 %v954
    %1090 = vmatpush.bf16.msra.mxu0 %v953
    %1091 = vmatpush.bf16.msra.mxu0 %v952
    %1092 = vmatpush.bf16.msra.mxu0 %v951
    %1093 = vmatpush.bf16.msra.mxu0 %v950
    %1094 = vmatpush.bf16.msra.mxu0 %v949
    %1095 = vmatmul.bf16.gmra.mxu0 %v539
    %v1096 = vpop.f32.mrf.mxu0
    %v1097 = vadd.f32 %v1084, %v1096
    %v1098 = vpop.f32.mrf.mxu0
    %1099 = vdwg.mxu0
    %1100 = vmatpush.bf16.msra.mxu0 %v964
    %1101 = vmatpush.bf16.msra.mxu0 %v963
    %1102 = vmatpush.bf16.msra.mxu0 %v962
    %1103 = vmatpush.bf16.msra.mxu0 %v961
    %1104 = vmatpush.bf16.msra.mxu0 %v960
    %1105 = vmatpush.bf16.msra.mxu0 %v959
    %1106 = vmatpush.bf16.msra.mxu0 %v958
    %1107 = vmatpush.bf16.msra.mxu0 %v957
    %1108 = vmatmul.bf16.gmra.mxu0 %v540
    %v1109 = vpop.f32.mrf.mxu0
    %v1110 = vadd.f32 %v1097, %v1109
    %v1111 = vpop.f32.mrf.mxu0
    %1112 = vdwg.mxu0
    %1113 = vmatpush.bf16.msra.mxu0 %v972
    %1114 = vmatpush.bf16.msra.mxu0 %v971
    %1115 = vmatpush.bf16.msra.mxu0 %v970
    %1116 = vmatpush.bf16.msra.mxu0 %v969
    %1117 = vmatpush.bf16.msra.mxu0 %v968
    %1118 = vmatpush.bf16.msra.mxu0 %v967
    %1119 = vmatpush.bf16.msra.mxu0 %v966
    %1120 = vmatpush.bf16.msra.mxu0 %v965
    %1121 = vmatmul.bf16.gmra.mxu0 %v541
    %v1122 = vpop.f32.mrf.mxu0
    %v1123 = vadd.f32 %v1110, %v1122
    %v1124 = vpop.f32.mrf.mxu0
    %1125 = vdwg.mxu0
    %1126 = vmatpush.bf16.msra.mxu0 %v980
    %1127 = vmatpush.bf16.msra.mxu0 %v979
    %1128 = vmatpush.bf16.msra.mxu0 %v978
    %1129 = vmatpush.bf16.msra.mxu0 %v977
    %1130 = vmatpush.bf16.msra.mxu0 %v976
    %1131 = vmatpush.bf16.msra.mxu0 %v975
    %1132 = vmatpush.bf16.msra.mxu0 %v974
    %1133 = vmatpush.bf16.msra.mxu0 %v973
    %1134 = vmatmul.bf16.gmra.mxu0 %v542
    %v1135 = vpop.f32.mrf.mxu0
    %v1136 = vadd.f32 %v1123, %v1135
    %v1137 = vpop.f32.mrf.mxu0
    %1138 = vdwg.mxu0
    %1139 = vmatpush.bf16.msra.mxu0 %v988
    %1140 = vmatpush.bf16.msra.mxu0 %v987
    %1141 = vmatpush.bf16.msra.mxu0 %v986
    %1142 = vmatpush.bf16.msra.mxu0 %v985
    %1143 = vmatpush.bf16.msra.mxu0 %v984
    %1144 = vmatpush.bf16.msra.mxu0 %v983
    %1145 = vmatpush.bf16.msra.mxu0 %v982
    %1146 = vmatpush.bf16.msra.mxu0 %v981
    %1147 = vmatmul.bf16.gmra.mxu0 %v543
    %v1148 = vpop.f32.mrf.mxu0
    %v1149 = vadd.f32 %v1136, %v1148
    %v1150 = vpop.f32.mrf.mxu0
    %1151 = vdwg.mxu0
    %1152 = vmatpush.bf16.msra.mxu0 %v996
    %1153 = vmatpush.bf16.msra.mxu0 %v995
    %1154 = vmatpush.bf16.msra.mxu0 %v994
    %1155 = vmatpush.bf16.msra.mxu0 %v993
    %1156 = vmatpush.bf16.msra.mxu0 %v992
    %1157 = vmatpush.bf16.msra.mxu0 %v991
    %1158 = vmatpush.bf16.msra.mxu0 %v990
    %1159 = vmatpush.bf16.msra.mxu0 %v989
    %1160 = vmatmul.bf16.gmra.mxu0 %v544
    %v1161 = vpop.f32.mrf.mxu0
    %v1162 = vadd.f32 %v1149, %v1161
    %v1163 = vpop.f32.mrf.mxu0
    %1164 = vdwg.mxu0
    %vm1165 = vcmask 523264
    %1166 = vst.msk [vmem:[#allocation2] sm:$0xff] %vm1165, %v1162
    // Predicated region
    $region22: #{tpu_custom_call.1} parent=1 // pred_check
      _
    $region23: #{tpu_custom_call.1} parent=1 // pred_check_branch
      %1168 = sbr.rel (0) target = $region25
    $region24: #{tpu_custom_call.1} parent=1 // pred_region
      %1170 = vsyncadd [#allocation3], 0
      %s1172 = sshll.u32 [#allocation2], 4
      %s1173 = int_to_ptr.vmem [resolvable:$true] %s1172
      %s1174 = sshll.u32 %s5, 4
      %s1175 = int_to_ptr.hbm [resolvable:$true] %s1174
      %1177 = dma.vmem_to_hbm [thread:$0]  %s1173, 128, %s1175, [#allocation3]
    $region25: #{tpu_custom_call.1} parent=1 // pred_fallthru
      _
    // Predicated region
    $region26: #{tpu_custom_call.1} parent=1 // pred_check
      _
    $region27: #{tpu_custom_call.1} parent=1 // pred_check_branch
      %1179 = sbr.rel (0) target = $region29
    $region28: #{tpu_custom_call.1} parent=1 // pred_region
      %1181 = dma.done [#allocation3], 128
    $region29: #{tpu_custom_call.1} parent=1 // pred_fallthru
      _
    %1182 = vsyncpa [#allocation3], 1

</llo_original>
